<compile_context>
chip_gen: v5e
topology: v5e:2x2
jax: 0.10.0
libtpu: 0.0.40
codegen_flags: <defaults>
</compile_context>

<pallas_src>
import math
import functools

import jax
import jax.numpy as jnp
from jax.experimental import pallas as pl
from jax.experimental.pallas import tpu as pltpu


def _round_up(x, m):
    return (x + m - 1) // m * m


# ----------------------------------------------------------------------------
# Kernel
# ----------------------------------------------------------------------------
def normgru_kernel(h_ref, x_ref, wh_ref, wx_ref, b_ref, gb_ref,
                   out_ref, hout_ref, *, h_pad, inv_h, eps):
    """One batch tile.

    h_ref  : (bt, Hp)        f32 h_prev; lanes [H:Hp) are zero
    x_ref  : (bt, in_dim)    f32 input
    wh_ref : (Hp, 4*Hp)      bf16 hidden weights, gate blocks [r | z | 0 | gh_n]
    wx_ref : (in_dim, 4*Hp)  bf16 input  weights, gate blocks [r | z | gi_n | 0]
    b_ref  : (1, 4*Hp)       f32 fused biases [b_r_sum | b_z_sum | b_in | b_hn]
    gb_ref : (2, Hp)         f32 row 0 = gamma, row 1 = beta (zero in pad lanes)
    """
    h_prev = h_ref[...]                                 # recurrence stays in f32
    wh = wh_ref[...]
    wx = wx_ref[...]

    # Two MXU dots (bf16 operands) accumulated in f32.
    g = jnp.dot(h_prev.astype(wh.dtype), wh, preferred_element_type=jnp.float32)
    g = g + jnp.dot(x_ref[...].astype(wx.dtype), wx,
                    preferred_element_type=jnp.float32)
    g = g + b_ref[...]

    Hp = h_pad
    r = jax.nn.sigmoid(g[:, 0 * Hp:1 * Hp])
    z = jax.nn.sigmoid(g[:, 1 * Hp:2 * Hp])
    n = jnp.tanh(g[:, 2 * Hp:3 * Hp] + r * g[:, 3 * Hp:4 * Hp])

    h_new = (1.0 - z) * n + z * h_prev                  # padded lanes stay 0

    # LayerNorm over the real `hidden` features.  Padded lanes of h_new are
    # exactly zero, so the sums below are exact without any lane mask.
    mean = jnp.sum(h_new, axis=-1, keepdims=True) * inv_h
    ex2 = jnp.sum(h_new * h_new, axis=-1, keepdims=True) * inv_h
    inv = jax.lax.rsqrt(ex2 - mean * mean + eps)

    gb = gb_ref[...]
    y = (h_new - mean) * inv * gb[0:1, :] + gb[1:2, :]  # gamma/beta zero in pad

    out_ref[...] = y.astype(out_ref.dtype)
    hout_ref[...] = h_new.astype(hout_ref.dtype)


# ----------------------------------------------------------------------------
# One-time parameter packing (torch-layout params -> fused, padded, transposed)
# ----------------------------------------------------------------------------
def pack_params(params, in_dim, out_dim, *, compute_dtype=jnp.bfloat16):
    H = out_dim
    Hp = max(_round_up(H, 128), 128)                   # per-gate lane padding
    # TODO(synk): for H < 128 the per-gate 128-lane padding over-computes gate
    # columns; acceptable while DMA-bound, pack gates contiguously otherwise.

    w_ih, w_hh = params["w_ih"], params["w_hh"]        # (3H,in_dim), (3H,H)
    b_ih, b_hh = params["b_ih"], params["b_hh"]

    W_ir, W_iz, W_in = w_ih[0:H], w_ih[H:2 * H], w_ih[2 * H:3 * H]
    W_hr, W_hz, W_hn = w_hh[0:H], w_hh[H:2 * H], w_hh[2 * H:3 * H]

    Wh = jnp.zeros((Hp, 4 * Hp), jnp.float32)          # contraction = h_prev
    Wh = Wh.at[0:H, 0 * Hp:0 * Hp + H].set(W_hr.T)
    Wh = Wh.at[0:H, 1 * Hp:1 * Hp + H].set(W_hz.T)
    Wh = Wh.at[0:H, 3 * Hp:3 * Hp + H].set(W_hn.T)     # gh_n: h only

    Wx = jnp.zeros((in_dim, 4 * Hp), jnp.float32)      # contraction = x
    Wx = Wx.at[:, 0 * Hp:0 * Hp + H].set(W_ir.T)
    Wx = Wx.at[:, 1 * Hp:1 * Hp + H].set(W_iz.T)
    Wx = Wx.at[:, 2 * Hp:2 * Hp + H].set(W_in.T)       # gi_n: x only

    b = jnp.zeros((1, 4 * Hp), jnp.float32)
    b = b.at[0, 0 * Hp:0 * Hp + H].set(b_ih[0:H] + b_hh[0:H])          # r
    b = b.at[0, 1 * Hp:1 * Hp + H].set(b_ih[H:2 * H] + b_hh[H:2 * H])  # z
    b = b.at[0, 2 * Hp:2 * Hp + H].set(b_ih[2 * H:3 * H])              # gi_n
    b = b.at[0, 3 * Hp:3 * Hp + H].set(b_hh[2 * H:3 * H])              # gh_n

    gb = jnp.zeros((2, Hp), jnp.float32)
    gb = gb.at[0, 0:H].set(params["gamma"])
    gb = gb.at[1, 0:H].set(params["beta"])

    return {"Wh": Wh.astype(compute_dtype), "Wx": Wx.astype(compute_dtype),
            "b": b, "gb": gb, "in_dim": in_dim, "H": H, "Hp": Hp}


# ----------------------------------------------------------------------------
# Wrapper
# ----------------------------------------------------------------------------
def norm_gru(m, h, packed, *, eps=1e-5, batch_tile=256):
    """m: (B, in_dim), h: (1, B, H)  ->  (out: (B, H), h_new: (1, B, H))."""
    B, in_dim = m.shape
    H, Hp = packed["H"], packed["Hp"]
    assert in_dim == packed["in_dim"]
    h2 = h.reshape(B, H)

    # Batch tile: prefer >= 2 grid steps so the "parallel" axis can shard across
    # v7x's 2 TensorCores; cap by batch_tile (VMEM budget when Hp is large).
    bt = min(batch_tile, _round_up(max(pl.cdiv(B, 2), 8), 8))
    Bp = _round_up(max(B, bt), bt)
    grid = (Bp // bt,)

    # h padded to the per-gate lane width (zeros in padded lanes/rows); x only
    # batch-padded.  No fused [h|x] materialization, no inter-block zero rows.
    if Bp == B and Hp == H:
        h_in = h2.astype(jnp.float32)
    else:
        h_in = jnp.zeros((Bp, Hp), jnp.float32).at[:B, :H].set(
            h2.astype(jnp.float32))
    if Bp == B:
        x_in = m.astype(jnp.float32)
    else:
        x_in = jnp.zeros((Bp, in_dim), jnp.float32).at[:B, :].set(
            m.astype(jnp.float32))

    Wh, Wx, b, gb = packed["Wh"], packed["Wx"], packed["b"], packed["gb"]
    w_itemsize = jnp.dtype(Wh.dtype).itemsize
    out_itemsize = jnp.dtype(m.dtype).itemsize

    # Scoped-VMEM budget: weights/bias/gamma-beta (pipeliner may keep 2 copies),
    # double-buffered activation + output tiles, gate temporaries, + headroom.
    vmem_bytes = 2 * (Wh.size + Wx.size) * w_itemsize
    vmem_bytes += 2 * (b.size + gb.size) * 4
    vmem_bytes += 2 * (bt * Hp + bt * in_dim) * 4          # h / x input tiles
    vmem_bytes += 2 * bt * Hp * (out_itemsize + 4)          # output tiles
    vmem_bytes += 2 * bt * 4 * Hp * 4                       # gate temporaries
    vmem_limit = min(max(int(vmem_bytes * 1.3) + (2 << 20), 32 << 20), 100 << 20)

    kernel = functools.partial(normgru_kernel, h_pad=Hp, inv_h=1.0 / H, eps=eps)

    flops = 2 * Bp * (Hp + in_dim) * 4 * Hp + 16 * Bp * Hp
    transcendentals = 4 * Bp * Hp                 # 2x sigmoid, tanh, rsqrt
    bytes_accessed = int((Wh.size + Wx.size) * w_itemsize
                         + (b.size + gb.size) * 4
                         + Bp * (Hp + in_dim) * 4
                         + Bp * Hp * (out_itemsize + 4))

    out_pad, hnew_pad = pl.pallas_call(
        kernel,
        out_shape=(
            jax.ShapeDtypeStruct((Bp, Hp), m.dtype),
            jax.ShapeDtypeStruct((Bp, Hp), jnp.float32),   # recurrence kept f32
        ),
        grid=grid,
        in_specs=[
            pl.BlockSpec((bt, Hp), lambda i: (i, 0)),          # h_prev: tiled
            pl.BlockSpec((bt, in_dim), lambda i: (i, 0)),      # x: tiled
            # Constant block index -> fetched once, VMEM-resident while batch
            # tiles stream.  TODO(synk): pipeline_mode=pl.Buffered(1) on these
            # to drop the second pipeline buffer for very large H (v7x 64 MiB).
            pl.BlockSpec((Hp, 4 * Hp), lambda i: (0, 0)),      # W_h
            pl.BlockSpec((in_dim, 4 * Hp), lambda i: (0, 0)),  # W_x
            pl.BlockSpec((1, 4 * Hp), lambda i: (0, 0)),       # fused bias
            pl.BlockSpec((2, Hp), lambda i: (0, 0)),           # gamma/beta
        ],
        out_specs=(
            pl.BlockSpec((bt, Hp), lambda i: (i, 0)),
            pl.BlockSpec((bt, Hp), lambda i: (i, 0)),
        ),
        compiler_params=pltpu.CompilerParams(
            dimension_semantics=("parallel",),                 # megacore on v7x
            vmem_limit_bytes=vmem_limit),
        cost_estimate=pl.CostEstimate(
            flops=flops, transcendentals=transcendentals,
            bytes_accessed=bytes_accessed),
    )(h_in, x_in, Wh, Wx, b, gb)

    # TODO(synk): for very large H on v7x (64 MiB VMEM/TC), add an "arbitrary"
    # K-reduction grid axis with an f32 VMEM accumulator instead of keeping the
    # full weight resident.
    # TODO(synk): if called per time-step from an outer scan, move the time loop
    # into the kernel (h carried in VMEM scratch / aliased output) so weights
    # are DMA'd once per sequence instead of once per step.
    # TODO(synk): callers that can consume the padded (Bp, Hp) outputs should
    # skip the un-pad slice below (it costs an extra HBM pass).
    out = out_pad[:B, :H]
    h_new = hnew_pad[:B, :H][None]
    return out, h_new


# ----------------------------------------------------------------------------
# Init + pure-JAX reference (torch.nn.GRU + LayerNorm semantics)
# ----------------------------------------------------------------------------
def init_params(key, in_dim, out_dim):
    k = 1.0 / math.sqrt(out_dim)
    k0, k1, k2, k3 = jax.random.split(key, 4)
    return {
        "w_ih": jax.random.uniform(k0, (3 * out_dim, in_dim), jnp.float32, -k, k),
        "w_hh": jax.random.uniform(k1, (3 * out_dim, out_dim), jnp.float32, -k, k),
        "b_ih": jax.random.uniform(k2, (3 * out_dim,), jnp.float32, -k, k),
        "b_hh": jax.random.uniform(k3, (3 * out_dim,), jnp.float32, -k, k),
        "gamma": jnp.ones((out_dim,), jnp.float32),
        "beta": jnp.zeros((out_dim,), jnp.float32),
    }


def norm_gru_reference(m, h, params, eps=1e-5):
    H = params["w_hh"].shape[1]
    h2 = h.reshape(-1, H)
    hi = jnp.dot(m, params["w_ih"].T, precision=jax.lax.Precision.HIGHEST) + params["b_ih"]
    hh = jnp.dot(h2, params["w_hh"].T, precision=jax.lax.Precision.HIGHEST) + params["b_hh"]
    r = jax.nn.sigmoid(hi[:, :H] + hh[:, :H])
    z = jax.nn.sigmoid(hi[:, H:2 * H] + hh[:, H:2 * H])
    n = jnp.tanh(hi[:, 2 * H:] + r * hh[:, 2 * H:])
    h_new = (1.0 - z) * n + z * h2
    mean = h_new.mean(-1, keepdims=True)
    var = ((h_new - mean) ** 2).mean(-1, keepdims=True)
    out = (h_new - mean) / jnp.sqrt(var + eps) * params["gamma"] + params["beta"]
    return out, h_new[None]


if __name__ == "__main__":
    in_dim, out_dim, batch = 32, 32, 8

    key = jax.random.PRNGKey(0)
    kp, km, kh = jax.random.split(key, 3)
    params = init_params(kp, in_dim, out_dim)
    packed = pack_params(params, in_dim, out_dim)      # pack + bf16-cast ONCE

    m = jax.random.normal(km, (batch, in_dim), jnp.float32)
    h0 = jax.random.normal(kh, (1, batch, out_dim), jnp.float32)

    out, h_new = norm_gru(m, h0, packed)
    jax.block_until_ready((out, h_new))

    assert out.shape == (batch, out_dim)
    assert h_new.shape == (1, batch, out_dim)

    out_ref, h_ref = norm_gru_reference(m, h0, params)
    assert float(jnp.max(jnp.abs(out - out_ref))) < 5e-2
    assert float(jnp.max(jnp.abs(h_new - h_ref))) < 5e-2
    assert bool(jnp.all(jnp.isfinite(out))) and bool(jnp.all(jnp.isfinite(h_new)))

    print("KERNEL_OK")
</pallas_src>

<mosaic_0001>
module attributes {stable_mosaic.version = 11 : i64} {
  func.func @normgru_kernel(%arg0: i32, %arg1: memref<8x128xf32, #tpu.memory_space<vmem>>, %arg2: memref<8x32xf32, #tpu.memory_space<vmem>>, %arg3: memref<128x512xbf16, #tpu.memory_space<vmem>>, %arg4: memref<32x512xbf16, #tpu.memory_space<vmem>>, %arg5: memref<1x512xf32, #tpu.memory_space<vmem>>, %arg6: memref<2x128xf32, #tpu.memory_space<vmem>>, %arg7: memref<8x128xf32, #tpu.memory_space<vmem>>, %arg8: memref<8x128xf32, #tpu.memory_space<vmem>>) attributes {dimension_semantics = [#tpu.dimension_semantics<parallel>], iteration_bounds = array<i64: 1>, scalar_prefetch = 0 : i64, scratch_operands = 0 : i64, tpu.core_type = #tpu.core_type<tc>, window_params = [{transform_indices = @transform_0, window_bounds = array<i64: 8, 128>}, {transform_indices = @transform_1, window_bounds = array<i64: 8, 32>}, {pipeline_mode = #tpu.pipeline_mode<synchronous>, transform_indices = @transform_2, window_bounds = array<i64: 128, 512>}, {pipeline_mode = #tpu.pipeline_mode<synchronous>, transform_indices = @transform_3, window_bounds = array<i64: 32, 512>}, {pipeline_mode = #tpu.pipeline_mode<synchronous>, transform_indices = @transform_4, window_bounds = array<i64: 1, 512>}, {pipeline_mode = #tpu.pipeline_mode<synchronous>, transform_indices = @transform_5, window_bounds = array<i64: 2, 128>}, {transform_indices = @transform_6, window_bounds = array<i64: 8, 128>}, {transform_indices = @transform_7, window_bounds = array<i64: 8, 128>}]} {
    %c0 = arith.constant 0 : index
    %c0_0 = arith.constant 0 : index
    %0 = vector.load %arg1[%c0, %c0_0] : memref<8x128xf32, #tpu.memory_space<vmem>>, vector<8x128xf32>
    %c0_1 = arith.constant 0 : index
    %c0_2 = arith.constant 0 : index
    %1 = vector.load %arg3[%c0_1, %c0_2] : memref<128x512xbf16, #tpu.memory_space<vmem>>, vector<128x512xbf16>
    %c0_3 = arith.constant 0 : index
    %c0_4 = arith.constant 0 : index
    %2 = vector.load %arg4[%c0_3, %c0_4] : memref<32x512xbf16, #tpu.memory_space<vmem>>, vector<32x512xbf16>
    %3 = arith.truncf %0 : vector<8x128xf32> to vector<8x128xbf16>
    %cst = arith.constant dense<0.000000e+00> : vector<8x512xf32>
    %4 = tpu.matmul %3, %1, %cst {dimension_numbers = #tpu.dot_dimension_numbers<[1], [0], [0], [1], [0, 0, 1, 1], [], []>} : vector<8x128xbf16>, vector<128x512xbf16>, vector<8x512xf32> -> vector<8x512xf32>
    %c0_5 = arith.constant 0 : index
    %c0_6 = arith.constant 0 : index
    %5 = vector.load %arg2[%c0_5, %c0_6] : memref<8x32xf32, #tpu.memory_space<vmem>>, vector<8x32xf32>
    %6 = arith.truncf %5 : vector<8x32xf32> to vector<8x32xbf16>
    %cst_7 = arith.constant dense<0.000000e+00> : vector<8x512xf32>
    %7 = tpu.matmul %6, %2, %cst_7 {dimension_numbers = #tpu.dot_dimension_numbers<[1], [0], [0], [1], [0, 0, 1, 1], [], []>} : vector<8x32xbf16>, vector<32x512xbf16>, vector<8x512xf32> -> vector<8x512xf32>
    %8 = arith.addf %4, %7 : vector<8x512xf32>
    %c0_8 = arith.constant 0 : index
    %c0_9 = arith.constant 0 : index
    %9 = vector.load %arg5[%c0_8, %c0_9] : memref<1x512xf32, #tpu.memory_space<vmem>>, vector<1x512xf32>
    %10 = vector.broadcast %9 : vector<1x512xf32> to vector<8x512xf32>
    %11 = arith.addf %8, %10 : vector<8x512xf32>
    %12 = vector.extract_strided_slice %11 {offsets = [0, 0], sizes = [8, 128], strides = [1, 1]} : vector<8x512xf32> to vector<8x128xf32>
    %13 = arith.negf %12 : vector<8x128xf32>
    %14 = math.exp %13 : vector<8x128xf32>
    %cst_10 = arith.constant 1.000000e+00 : f32
    %15 = vector.broadcast %cst_10 : f32 to vector<8x128xf32>
    %16 = arith.addf %15, %14 : vector<8x128xf32>
    %17 = arith.divf %15, %16 : vector<8x128xf32>
    %18 = vector.extract_strided_slice %11 {offsets = [0, 128], sizes = [8, 128], strides = [1, 1]} : vector<8x512xf32> to vector<8x128xf32>
    %19 = arith.negf %18 : vector<8x128xf32>
    %20 = math.exp %19 : vector<8x128xf32>
    %cst_11 = arith.constant 1.000000e+00 : f32
    %21 = vector.broadcast %cst_11 : f32 to vector<8x128xf32>
    %22 = arith.addf %21, %20 : vector<8x128xf32>
    %23 = arith.divf %21, %22 : vector<8x128xf32>
    %24 = vector.extract_strided_slice %11 {offsets = [0, 256], sizes = [8, 128], strides = [1, 1]} : vector<8x512xf32> to vector<8x128xf32>
    %25 = vector.extract_strided_slice %11 {offsets = [0, 384], sizes = [8, 128], strides = [1, 1]} : vector<8x512xf32> to vector<8x128xf32>
    %26 = arith.mulf %17, %25 : vector<8x128xf32>
    %27 = arith.addf %24, %26 : vector<8x128xf32>
    %28 = math.tanh %27 : vector<8x128xf32>
    %cst_12 = arith.constant 1.000000e+00 : f32
    %29 = vector.broadcast %cst_12 : f32 to vector<8x128xf32>
    %30 = arith.subf %29, %23 : vector<8x128xf32>
    %31 = arith.mulf %30, %28 : vector<8x128xf32>
    %32 = arith.mulf %23, %0 : vector<8x128xf32>
    %33 = arith.addf %31, %32 : vector<8x128xf32>
    %cst_13 = arith.constant dense<0.000000e+00> : vector<8xf32>
    %34 = vector.multi_reduction <add>, %33, %cst_13 [1] : vector<8x128xf32> to vector<8xf32>
    %35 = vector.shape_cast %34 : vector<8xf32> to vector<8x1xf32>
    %cst_14 = arith.constant 3.125000e-02 : f32
    %36 = vector.broadcast %cst_14 : f32 to vector<8x1xf32>
    %37 = arith.mulf %35, %36 : vector<8x1xf32>
    %38 = arith.mulf %33, %33 : vector<8x128xf32>
    %cst_15 = arith.constant dense<0.000000e+00> : vector<8xf32>
    %39 = vector.multi_reduction <add>, %38, %cst_15 [1] : vector<8x128xf32> to vector<8xf32>
    %40 = vector.shape_cast %39 : vector<8xf32> to vector<8x1xf32>
    %cst_16 = arith.constant 3.125000e-02 : f32
    %41 = vector.broadcast %cst_16 : f32 to vector<8x1xf32>
    %42 = arith.mulf %40, %41 : vector<8x1xf32>
    %43 = arith.mulf %37, %37 : vector<8x1xf32>
    %44 = arith.subf %42, %43 : vector<8x1xf32>
    %cst_17 = arith.constant 9.99999974E-6 : f32
    %45 = vector.broadcast %cst_17 : f32 to vector<8x1xf32>
    %46 = arith.addf %44, %45 : vector<8x1xf32>
    %47 = math.rsqrt %46 : vector<8x1xf32>
    %c0_18 = arith.constant 0 : index
    %c0_19 = arith.constant 0 : index
    %48 = vector.load %arg6[%c0_18, %c0_19] : memref<2x128xf32, #tpu.memory_space<vmem>>, vector<2x128xf32>
    %49 = vector.broadcast %37 : vector<8x1xf32> to vector<8x128xf32>
    %50 = arith.subf %33, %49 : vector<8x128xf32>
    %51 = vector.broadcast %47 : vector<8x1xf32> to vector<8x128xf32>
    %52 = arith.mulf %50, %51 : vector<8x128xf32>
    %53 = vector.extract_strided_slice %48 {offsets = [0, 0], sizes = [1, 128], strides = [1, 1]} : vector<2x128xf32> to vector<1x128xf32>
    %54 = vector.broadcast %53 : vector<1x128xf32> to vector<8x128xf32>
    %55 = arith.mulf %52, %54 : vector<8x128xf32>
    %56 = vector.extract_strided_slice %48 {offsets = [1, 0], sizes = [1, 128], strides = [1, 1]} : vector<2x128xf32> to vector<1x128xf32>
    %57 = vector.broadcast %56 : vector<1x128xf32> to vector<8x128xf32>
    %58 = arith.addf %55, %57 : vector<8x128xf32>
    %c0_20 = arith.constant 0 : index
    %c0_21 = arith.constant 0 : index
    %59 = vector.load %arg7[%c0_20, %c0_21] : memref<8x128xf32, #tpu.memory_space<vmem>>, vector<8x128xf32>
    tpu.vector_store %arg7[%c0_20, %c0_21], %58 {strides = array<i32>} : memref<8x128xf32, #tpu.memory_space<vmem>>, vector<8x128xf32>,
    %c0_22 = arith.constant 0 : index
    %c0_23 = arith.constant 0 : index
    %60 = vector.load %arg8[%c0_22, %c0_23] : memref<8x128xf32, #tpu.memory_space<vmem>>, vector<8x128xf32>
    tpu.vector_store %arg8[%c0_22, %c0_23], %33 {strides = array<i32>} : memref<8x128xf32, #tpu.memory_space<vmem>>, vector<8x128xf32>,
    return
  }
  func.func @transform_0(%arg0: i32) -> (i32, i32) {
    %c0_i32 = arith.constant 0 : i32
    %c0_i32_0 = arith.constant 0 : i32
    return %arg0, %c0_i32 : i32, i32
  }
  func.func @transform_1(%arg0: i32) -> (i32, i32) {
    %c0_i32 = arith.constant 0 : i32
    %c0_i32_0 = arith.constant 0 : i32
    return %arg0, %c0_i32 : i32, i32
  }
  func.func @transform_2(%arg0: i32) -> (i32, i32) {
    %c0_i32 = arith.constant 0 : i32
    %c0_i32_0 = arith.constant 0 : i32
    %c0_i32_1 = arith.constant 0 : i32
    return %c0_i32, %c0_i32_0 : i32, i32
  }
  func.func @transform_3(%arg0: i32) -> (i32, i32) {
    %c0_i32 = arith.constant 0 : i32
    %c0_i32_0 = arith.constant 0 : i32
    %c0_i32_1 = arith.constant 0 : i32
    return %c0_i32, %c0_i32_0 : i32, i32
  }
  func.func @transform_4(%arg0: i32) -> (i32, i32) {
    %c0_i32 = arith.constant 0 : i32
    %c0_i32_0 = arith.constant 0 : i32
    %c0_i32_1 = arith.constant 0 : i32
    return %c0_i32, %c0_i32_0 : i32, i32
  }
  func.func @transform_5(%arg0: i32) -> (i32, i32) {
    %c0_i32 = arith.constant 0 : i32
    %c0_i32_0 = arith.constant 0 : i32
    %c0_i32_1 = arith.constant 0 : i32
    return %c0_i32, %c0_i32_0 : i32, i32
  }
  func.func @transform_6(%arg0: i32) -> (i32, i32) {
    %c0_i32 = arith.constant 0 : i32
    %c0_i32_0 = arith.constant 0 : i32
    return %arg0, %c0_i32 : i32, i32
  }
  func.func @transform_7(%arg0: i32) -> (i32, i32) {
    %c0_i32 = arith.constant 0 : i32
    %c0_i32_0 = arith.constant 0 : i32
    return %arg0, %c0_i32 : i32, i32
  }
}

</mosaic_0001>

<llo_original>
// kernel: tpu_custom_call.1
$region0: #{tpu_custom_call.1}
  #allocation0 [shape = 'u32[]', space=smem, size = 0x4, offset = 0x4, fixed_abs, tag = 'smem constant byte address 0x4 - core index']
  #allocation1 [shape = 'u32[72,128]{1,0:T(1,128)}', space=vmem, size = 0x9000, scoped, tag = 'internal scratch']
  %s0 = inlined_call_operand.hbm [shape: f32[8,128], index: 0, kind: input, shape index: {}]
  %s1 = inlined_call_operand.hbm [shape: f32[8,32], index: 1, kind: input, shape index: {}]
  %s2 = inlined_call_operand.hbm [shape: bf16[128,512], index: 2, kind: input, shape index: {}]
  %s3 = inlined_call_operand.hbm [shape: bf16[32,512], index: 3, kind: input, shape index: {}]
  %s4 = inlined_call_operand.hbm [shape: f32[1,512], index: 4, kind: input, shape index: {}]
  %s5 = inlined_call_operand.vmem [shape: f32[2,128], index: 5, kind: input, shape index: {}]
  %s6 = inlined_call_operand.hbm [shape: f32[8,128], index: 6, kind: output, shape index: {0}]
  %s7 = inlined_call_operand.hbm [shape: f32[8,128], index: 7, kind: output, shape index: {1}]
  %8 = xla_tuple %s6, %s7
  %s9 = sld [smem:[#allocation0]]
  $region62: #{tpu_custom_call.1} parent=0
    _
  %s11 = ssub.s32 1, %s9
  %s12 = scalar_select 0, %s11, %s9
  $region1: #{tpu_custom_call.1} parent=0
    #allocation2 [shape = 'u8[4096]{0}', space=vmem, size = 0x1000, scoped, tag = 'input window, operand 0, single buffered']
    #allocation3 [shape = 's32[1]{0}', space=sflag, size = 0x4, scoped, tag = 'scoped memory for tpu_custom_call.1']
    #allocation4 [shape = 's32[1]{0}', space=sflag, size = 0x4, scoped, tag = 'scoped memory for tpu_custom_call.1']
    #allocation5 [shape = 'u8[4096]{0}', space=vmem, size = 0x1000, scoped, tag = 'input window, operand 1, single buffered']
    #allocation6 [shape = 's32[1]{0}', space=sflag, size = 0x4, scoped, tag = 'scoped memory for tpu_custom_call.1']
    #allocation7 [shape = 'u8[131072]{0}', space=vmem, size = 0x20000, scoped, tag = 'input window, operand 2, single buffered']
    #allocation8 [shape = 'u8[32768]{0}', space=vmem, size = 0x8000, scoped, tag = 'input window, operand 3, single buffered']
    #allocation9 [shape = 's32[1]{0}', space=sflag, size = 0x4, scoped, tag = 'scoped memory for tpu_custom_call.1']
    #allocation10 [shape = 'u8[2048]{0}', space=vmem, size = 0x800, scoped, tag = 'input window, operand 4, single buffered']
    #allocation11 [shape = 'u8[4096]{0}', space=vmem, size = 0x1000, scoped, tag = 'output window, operand 0, single buffered']
    #allocation12 [shape = 'u8[4096]{0}', space=vmem, size = 0x1000, scoped, tag = 'output window, operand 1, single buffered']
    #allocation13 [shape = 's32[1]{0}', space=sflag, size = 0x4, scoped, tag = 'scoped memory for tpu_custom_call.1']
    %13 = vsyncpa [#allocation3], 0
    %14 = vsyncpa [#allocation6], 0
    %15 = vsyncpa [#allocation9], 0
    %16 = vsyncpa [#allocation4], 0
    %17 = vsyncpa [#allocation13], 0
    // Predicated region
    $region2: #{tpu_custom_call.1} parent=1 // pred_check
      _
    $region3: #{tpu_custom_call.1} parent=1 // pred_check_branch
      %19 = sbr.rel (0) target = $region5
    $region4: #{tpu_custom_call.1} parent=1 // pred_region
      %21 = vsyncadd [#allocation3], 0
      %s23 = sshll.u32 %s0, 4
      %s24 = int_to_ptr.hbm [resolvable:$true] %s23
      %s25 = sshll.u32 [#allocation2], 4
      %s26 = int_to_ptr.vmem [resolvable:$true] %s25
      %28 = dma.hbm_to_vmem [thread:$0]  %s24, 128, %s26, [#allocation3]
    $region5: #{tpu_custom_call.1} parent=1 // pred_fallthru
      _
    // Predicated region
    $region6: #{tpu_custom_call.1} parent=1 // pred_check
      _
    $region7: #{tpu_custom_call.1} parent=1 // pred_check_branch
      %30 = sbr.rel (0) target = $region9
    $region8: #{tpu_custom_call.1} parent=1 // pred_region
      %32 = vsyncadd [#allocation6], 0
      %s34 = sshll.u32 %s1, 4
      %s35 = int_to_ptr.hbm [resolvable:$true] %s34
      %s36 = sshll.u32 [#allocation5], 4
      %s37 = int_to_ptr.vmem [resolvable:$true] %s36
      %39 = dma.hbm_to_vmem [thread:$0]  %s35, 128, %s37, [#allocation6]
    $region9: #{tpu_custom_call.1} parent=1 // pred_fallthru
      _
    // Predicated region
    $region10: #{tpu_custom_call.1} parent=1 // pred_check
      _
    $region11: #{tpu_custom_call.1} parent=1 // pred_check_branch
      %41 = sbr.rel (0) target = $region13
    $region12: #{tpu_custom_call.1} parent=1 // pred_region
      %43 = vsyncadd [#allocation6], 0
      %s44 = sshll.u32 %s2, 4
      %s45 = int_to_ptr.hbm [resolvable:$true] %s44
      %s46 = sshll.u32 [#allocation7], 4
      %s47 = int_to_ptr.vmem [resolvable:$true] %s46
      %52 = dma.hbm_to_vmem [thread:$0]  %s45, 4096, %s47, [#allocation6], 256, 256, 16
    $region13: #{tpu_custom_call.1} parent=1 // pred_fallthru
      _
    // Predicated region
    $region14: #{tpu_custom_call.1} parent=1 // pred_check
      _
    $region15: #{tpu_custom_call.1} parent=1 // pred_check_branch
      %54 = sbr.rel (0) target = $region17
    $region16: #{tpu_custom_call.1} parent=1 // pred_region
      %56 = vsyncadd [#allocation9], 0
      %s57 = sshll.u32 %s3, 4
      %s58 = int_to_ptr.hbm [resolvable:$true] %s57
      %s59 = sshll.u32 [#allocation8], 4
      %s60 = int_to_ptr.vmem [resolvable:$true] %s59
      %65 = dma.hbm_to_vmem [thread:$0]  %s58, 1024, %s60, [#allocation9], 256, 256, 16
    $region17: #{tpu_custom_call.1} parent=1 // pred_fallthru
      _
    // Predicated region
    $region18: #{tpu_custom_call.1} parent=1 // pred_check
      _
    $region19: #{tpu_custom_call.1} parent=1 // pred_check_branch
      %67 = sbr.rel (0) target = $region21
    $region20: #{tpu_custom_call.1} parent=1 // pred_region
      %69 = vsyncadd [#allocation9], 0
      %s71 = sshll.u32 %s4, 4
      %s72 = int_to_ptr.hbm [resolvable:$true] %s71
      %s73 = sshll.u32 [#allocation10], 4
      %s74 = int_to_ptr.vmem [resolvable:$true] %s73
      %76 = dma.hbm_to_vmem [thread:$0]  %s72, 64, %s74, [#allocation9]
    $region21: #{tpu_custom_call.1} parent=1 // pred_fallthru
      _
    // Predicated region
    $region22: #{tpu_custom_call.1} parent=1 // pred_check
      _
    $region23: #{tpu_custom_call.1} parent=1 // pred_check_branch
      %78 = sbr.rel (0) target = $region25
    $region24: #{tpu_custom_call.1} parent=1 // pred_region
      _
    $region25: #{tpu_custom_call.1} parent=1 // pred_fallthru
      _
    // Predicated region
    $region26: #{tpu_custom_call.1} parent=1 // pred_check
      _
    $region27: #{tpu_custom_call.1} parent=1 // pred_check_branch
      %80 = sbr.rel (0) target = $region29
    $region28: #{tpu_custom_call.1} parent=1 // pred_region
      %82 = dma.done [#allocation3], 128
    $region29: #{tpu_custom_call.1} parent=1 // pred_fallthru
      _
    // Predicated region
    $region30: #{tpu_custom_call.1} parent=1 // pred_check
      _
    $region31: #{tpu_custom_call.1} parent=1 // pred_check_branch
      %84 = sbr.rel (0) target = $region33
    $region32: #{tpu_custom_call.1} parent=1 // pred_region
      %86 = dma.done [#allocation6], 128
    $region33: #{tpu_custom_call.1} parent=1 // pred_fallthru
      _
    // Predicated region
    $region34: #{tpu_custom_call.1} parent=1 // pred_check
      _
    $region35: #{tpu_custom_call.1} parent=1 // pred_check_branch
      %88 = sbr.rel (0) target = $region37
    $region36: #{tpu_custom_call.1} parent=1 // pred_region
      %90 = dma.done [#allocation6], 4096
    $region37: #{tpu_custom_call.1} parent=1 // pred_fallthru
      _
    // Predicated region
    $region38: #{tpu_custom_call.1} parent=1 // pred_check
      _
    $region39: #{tpu_custom_call.1} parent=1 // pred_check_branch
      %92 = sbr.rel (0) target = $region41
    $region40: #{tpu_custom_call.1} parent=1 // pred_region
      %94 = dma.done [#allocation9], 1024
    $region41: #{tpu_custom_call.1} parent=1 // pred_fallthru
      _
    // Predicated region
    $region42: #{tpu_custom_call.1} parent=1 // pred_check
      _
    $region43: #{tpu_custom_call.1} parent=1 // pred_check_branch
      %96 = sbr.rel (0) target = $region45
    $region44: #{tpu_custom_call.1} parent=1 // pred_region
      %98 = dma.done [#allocation9], 64
    $region45: #{tpu_custom_call.1} parent=1 // pred_fallthru
      _
    %v100 = vld [vmem:[#allocation2] sm:$0xff]
    %v101 = vld [vmem:[#allocation7] sm:$0xff]
    %v102 = vld [vmem:[#allocation7 + $0x8] sm:$0xff]
    %v103 = vld [vmem:[#allocation7 + $0x10] sm:$0xff]
    %v104 = vld [vmem:[#allocation7 + $0x18] sm:$0xff]
    %v105 = vld [vmem:[#allocation7 + $0x20] sm:$0xff]
    %v106 = vld [vmem:[#allocation7 + $0x28] sm:$0xff]
    %v107 = vld [vmem:[#allocation7 + $0x30] sm:$0xff]
    %v108 = vld [vmem:[#allocation7 + $0x38] sm:$0xff]
    %v109 = vld [vmem:[#allocation7 + $0x40] sm:$0xff]
    %v110 = vld [vmem:[#allocation7 + $0x48] sm:$0xff]
    %v111 = vld [vmem:[#allocation7 + $0x50] sm:$0xff]
    %v112 = vld [vmem:[#allocation7 + $0x58] sm:$0xff]
    %v113 = vld [vmem:[#allocation7 + $0x60] sm:$0xff]
    %v114 = vld [vmem:[#allocation7 + $0x68] sm:$0xff]
    %v115 = vld [vmem:[#allocation7 + $0x70] sm:$0xff]
    %v116 = vld [vmem:[#allocation7 + $0x78] sm:$0xff]
    %v117 = vld [vmem:[#allocation7 + $0x80] sm:$0xff]
    %v118 = vld [vmem:[#allocation7 + $0x88] sm:$0xff]
    %v119 = vld [vmem:[#allocation7 + $0x90] sm:$0xff]
    %v120 = vld [vmem:[#allocation7 + $0x98] sm:$0xff]
    %v121 = vld [vmem:[#allocation7 + $0xa0] sm:$0xff]
    %v122 = vld [vmem:[#allocation7 + $0xa8] sm:$0xff]
    %v123 = vld [vmem:[#allocation7 + $0xb0] sm:$0xff]
    %v124 = vld [vmem:[#allocation7 + $0xb8] sm:$0xff]
    %v125 = vld [vmem:[#allocation7 + $0xc0] sm:$0xff]
    %v126 = vld [vmem:[#allocation7 + $0xc8] sm:$0xff]
    %v127 = vld [vmem:[#allocation7 + $0xd0] sm:$0xff]
    %v128 = vld [vmem:[#allocation7 + $0xd8] sm:$0xff]
    %v129 = vld [vmem:[#allocation7 + $0xe0] sm:$0xff]
    %v130 = vld [vmem:[#allocation7 + $0xe8] sm:$0xff]
    %v131 = vld [vmem:[#allocation7 + $0xf0] sm:$0xff]
    %v132 = vld [vmem:[#allocation7 + $0xf8] sm:$0xff]
    %v133 = vld [vmem:[#allocation8] sm:$0xff]
    %v134 = vld [vmem:[#allocation8 + $0x8] sm:$0xff]
    %v135 = vld [vmem:[#allocation8 + $0x10] sm:$0xff]
    %v136 = vld [vmem:[#allocation8 + $0x18] sm:$0xff]
    %v137 = vld [vmem:[#allocation8 + $0x20] sm:$0xff]
    %v138 = vld [vmem:[#allocation8 + $0x28] sm:$0xff]
    %v139 = vld [vmem:[#allocation8 + $0x30] sm:$0xff]
    %v140 = vld [vmem:[#allocation8 + $0x38] sm:$0xff]
    %v141 = vpack.c.bf16 %v100, %v100
    %v142 = vld [vmem:[#allocation5] sm:$0xff]
    %v143 = vpack.c.bf16 %v142, %v142
    %v152 = vunpack.c.l.b16 %v133
    %v153 = vunpack.c.h.b16 %v133
    %v154 = vunpack.c.l.b16 %v134
    %v155 = vunpack.c.h.b16 %v134
    %v156 = vunpack.c.l.b16 %v135
    %v157 = vunpack.c.h.b16 %v135
    %v158 = vunpack.c.l.b16 %v136
    %v159 = vunpack.c.h.b16 %v136
    %v160 = vunpack.c.l.b16 %v137
    %v161 = vunpack.c.h.b16 %v137
    %v162 = vunpack.c.l.b16 %v138
    %v163 = vunpack.c.h.b16 %v138
    %v164 = vunpack.c.l.b16 %v139
    %v165 = vunpack.c.h.b16 %v139
    %v166 = vunpack.c.l.b16 %v140
    %v167 = vunpack.c.h.b16 %v140
    %v168 = vpack.c.b16 %v156, %v152
    %v169 = vpack.c.b16 %v157, %v153
    %v170 = vpack.c.b16 %v158, %v154
    %v171 = vpack.c.b16 %v159, %v155
    %v172 = vpack.c.b16 %v164, %v160
    %v173 = vpack.c.b16 %v165, %v161
    %v174 = vpack.c.b16 %v166, %v162
    %v175 = vpack.c.b16 %v167, %v163
    %vm184 = vcmask 261120
    %v186 = vsel %vm184, %v143, 0
    %188 = vmatpush.bf16.msra.mxu0 0
    %189 = vmatpush.bf16.msra.mxu0 0
    %190 = vmatpush.bf16.msra.mxu0 0
    %191 = vmatpush.bf16.msra.mxu0 0
    %192 = vmatpush.bf16.msra.mxu0 0
    %193 = vmatpush.bf16.msra.mxu0 0
    %194 = vmatpush.bf16.msra.mxu0 %v172
    %195 = vmatpush.bf16.msra.mxu0 %v168
    %196 = vmatmul.bf16.gmra.mxu0 %v186
    %v197 = vpop.f32.mrf.mxu0
    %v198 = vadd.f32 0.0, %v197
    %v199 = vpop.f32.mrf.mxu0
    %200 = vdwg.mxu0
    %201 = vmatpush.bf16.msra.mxu0 0
    %202 = vmatpush.bf16.msra.mxu0 0
    %203 = vmatpush.bf16.msra.mxu0 0
    %204 = vmatpush.bf16.msra.mxu0 0
    %205 = vmatpush.bf16.msra.mxu0 0
    %206 = vmatpush.bf16.msra.mxu0 0
    %207 = vmatpush.bf16.msra.mxu0 %v173
    %208 = vmatpush.bf16.msra.mxu0 %v169
    %209 = vmatmul.bf16.gmra.mxu0 %v186
    %v210 = vpop.f32.mrf.mxu0
    %v211 = vadd.f32 0.0, %v210
    %v212 = vpop.f32.mrf.mxu0
    %213 = vdwg.mxu0
    %214 = vmatpush.bf16.msra.mxu0 0
    %215 = vmatpush.bf16.msra.mxu0 0
    %216 = vmatpush.bf16.msra.mxu0 0
    %217 = vmatpush.bf16.msra.mxu0 0
    %218 = vmatpush.bf16.msra.mxu0 0
    %219 = vmatpush.bf16.msra.mxu0 0
    %220 = vmatpush.bf16.msra.mxu0 %v174
    %221 = vmatpush.bf16.msra.mxu0 %v170
    %222 = vmatmul.bf16.gmra.mxu0 %v186
    %v223 = vpop.f32.mrf.mxu0
    %v224 = vadd.f32 0.0, %v223
    %v225 = vpop.f32.mrf.mxu0
    %226 = vdwg.mxu0
    %227 = vmatpush.bf16.msra.mxu0 0
    %228 = vmatpush.bf16.msra.mxu0 0
    %229 = vmatpush.bf16.msra.mxu0 0
    %230 = vmatpush.bf16.msra.mxu0 0
    %231 = vmatpush.bf16.msra.mxu0 0
    %232 = vmatpush.bf16.msra.mxu0 0
    %233 = vmatpush.bf16.msra.mxu0 %v175
    %234 = vmatpush.bf16.msra.mxu0 %v171
    %235 = vmatmul.bf16.gmra.mxu0 %v186
    %v236 = vpop.f32.mrf.mxu0
    %v237 = vadd.f32 0.0, %v236
    %v238 = vpop.f32.mrf.mxu0
    %239 = vdwg.mxu0
    %v272 = vunpack.c.l.b16 %v101
    %v273 = vunpack.c.h.b16 %v101
    %v274 = vunpack.c.l.b16 %v102
    %v275 = vunpack.c.h.b16 %v102
    %v276 = vunpack.c.l.b16 %v103
    %v277 = vunpack.c.h.b16 %v103
    %v278 = vunpack.c.l.b16 %v104
    %v279 = vunpack.c.h.b16 %v104
    %v280 = vunpack.c.l.b16 %v105
    %v281 = vunpack.c.h.b16 %v105
    %v282 = vunpack.c.l.b16 %v106
    %v283 = vunpack.c.h.b16 %v106
    %v284 = vunpack.c.l.b16 %v107
    %v285 = vunpack.c.h.b16 %v107
    %v286 = vunpack.c.l.b16 %v108
    %v287 = vunpack.c.h.b16 %v108
    %v288 = vunpack.c.l.b16 %v109
    %v289 = vunpack.c.h.b16 %v109
    %v290 = vunpack.c.l.b16 %v110
    %v291 = vunpack.c.h.b16 %v110
    %v292 = vunpack.c.l.b16 %v111
    %v293 = vunpack.c.h.b16 %v111
    %v294 = vunpack.c.l.b16 %v112
    %v295 = vunpack.c.h.b16 %v112
    %v296 = vunpack.c.l.b16 %v113
    %v297 = vunpack.c.h.b16 %v113
    %v298 = vunpack.c.l.b16 %v114
    %v299 = vunpack.c.h.b16 %v114
    %v300 = vunpack.c.l.b16 %v115
    %v301 = vunpack.c.h.b16 %v115
    %v302 = vunpack.c.l.b16 %v116
    %v303 = vunpack.c.h.b16 %v116
    %v304 = vunpack.c.l.b16 %v117
    %v305 = vunpack.c.h.b16 %v117
    %v306 = vunpack.c.l.b16 %v118
    %v307 = vunpack.c.h.b16 %v118
    %v308 = vunpack.c.l.b16 %v119
    %v309 = vunpack.c.h.b16 %v119
    %v310 = vunpack.c.l.b16 %v120
    %v311 = vunpack.c.h.b16 %v120
    %v312 = vunpack.c.l.b16 %v121
    %v313 = vunpack.c.h.b16 %v121
    %v314 = vunpack.c.l.b16 %v122
    %v315 = vunpack.c.h.b16 %v122
    %v316 = vunpack.c.l.b16 %v123
    %v317 = vunpack.c.h.b16 %v123
    %v318 = vunpack.c.l.b16 %v124
    %v319 = vunpack.c.h.b16 %v124
    %v320 = vunpack.c.l.b16 %v125
    %v321 = vunpack.c.h.b16 %v125
    %v322 = vunpack.c.l.b16 %v126
    %v323 = vunpack.c.h.b16 %v126
    %v324 = vunpack.c.l.b16 %v127
    %v325 = vunpack.c.h.b16 %v127
    %v326 = vunpack.c.l.b16 %v128
    %v327 = vunpack.c.h.b16 %v128
    %v328 = vunpack.c.l.b16 %v129
    %v329 = vunpack.c.h.b16 %v129
    %v330 = vunpack.c.l.b16 %v130
    %v331 = vunpack.c.h.b16 %v130
    %v332 = vunpack.c.l.b16 %v131
    %v333 = vunpack.c.h.b16 %v131
    %v334 = vunpack.c.l.b16 %v132
    %v335 = vunpack.c.h.b16 %v132
    %v336 = vpack.c.b16 %v276, %v272
    %v337 = vpack.c.b16 %v277, %v273
    %v338 = vpack.c.b16 %v278, %v274
    %v339 = vpack.c.b16 %v279, %v275
    %v340 = vpack.c.b16 %v284, %v280
    %v341 = vpack.c.b16 %v285, %v281
    %v342 = vpack.c.b16 %v286, %v282
    %v343 = vpack.c.b16 %v287, %v283
    %v344 = vpack.c.b16 %v292, %v288
    %v345 = vpack.c.b16 %v293, %v289
    %v346 = vpack.c.b16 %v294, %v290
    %v347 = vpack.c.b16 %v295, %v291
    %v348 = vpack.c.b16 %v300, %v296
    %v349 = vpack.c.b16 %v301, %v297
    %v350 = vpack.c.b16 %v302, %v298
    %v351 = vpack.c.b16 %v303, %v299
    %v352 = vpack.c.b16 %v308, %v304
    %v353 = vpack.c.b16 %v309, %v305
    %v354 = vpack.c.b16 %v310, %v306
    %v355 = vpack.c.b16 %v311, %v307
    %v356 = vpack.c.b16 %v316, %v312
    %v357 = vpack.c.b16 %v317, %v313
    %v358 = vpack.c.b16 %v318, %v314
    %v359 = vpack.c.b16 %v319, %v315
    %v360 = vpack.c.b16 %v324, %v320
    %v361 = vpack.c.b16 %v325, %v321
    %v362 = vpack.c.b16 %v326, %v322
    %v363 = vpack.c.b16 %v327, %v323
    %v364 = vpack.c.b16 %v332, %v328
    %v365 = vpack.c.b16 %v333, %v329
    %v366 = vpack.c.b16 %v334, %v330
    %v367 = vpack.c.b16 %v335, %v331
    %400 = vmatpush.bf16.msra.mxu0 %v364
    %401 = vmatpush.bf16.msra.mxu0 %v360
    %402 = vmatpush.bf16.msra.mxu0 %v356
    %403 = vmatpush.bf16.msra.mxu0 %v352
    %404 = vmatpush.bf16.msra.mxu0 %v348
    %405 = vmatpush.bf16.msra.mxu0 %v344
    %406 = vmatpush.bf16.msra.mxu0 %v340
    %407 = vmatpush.bf16.msra.mxu0 %v336
    %408 = vmatmul.bf16.gmra.mxu0 %v141
    %v409 = vpop.f32.mrf.mxu0
    %v410 = vadd.f32 %v198, %v409
    %v411 = vpop.f32.mrf.mxu0
    %412 = vdwg.mxu0
    %413 = vmatpush.bf16.msra.mxu0 %v365
    %414 = vmatpush.bf16.msra.mxu0 %v361
    %415 = vmatpush.bf16.msra.mxu0 %v357
    %416 = vmatpush.bf16.msra.mxu0 %v353
    %417 = vmatpush.bf16.msra.mxu0 %v349
    %418 = vmatpush.bf16.msra.mxu0 %v345
    %419 = vmatpush.bf16.msra.mxu0 %v341
    %420 = vmatpush.bf16.msra.mxu0 %v337
    %421 = vmatmul.bf16.gmra.mxu0 %v141
    %v422 = vpop.f32.mrf.mxu0
    %v423 = vadd.f32 %v211, %v422
    %v424 = vpop.f32.mrf.mxu0
    %425 = vdwg.mxu0
    %426 = vmatpush.bf16.msra.mxu0 %v366
    %427 = vmatpush.bf16.msra.mxu0 %v362
    %428 = vmatpush.bf16.msra.mxu0 %v358
    %429 = vmatpush.bf16.msra.mxu0 %v354
    %430 = vmatpush.bf16.msra.mxu0 %v350
    %431 = vmatpush.bf16.msra.mxu0 %v346
    %432 = vmatpush.bf16.msra.mxu0 %v342
    %433 = vmatpush.bf16.msra.mxu0 %v338
    %434 = vmatmul.bf16.gmra.mxu0 %v141
    %v435 = vpop.f32.mrf.mxu0
    %v436 = vadd.f32 %v224, %v435
    %v437 = vpop.f32.mrf.mxu0
    %438 = vdwg.mxu0
    %439 = vmatpush.bf16.msra.mxu0 %v367
    %440 = vmatpush.bf16.msra.mxu0 %v363
    %441 = vmatpush.bf16.msra.mxu0 %v359
    %442 = vmatpush.bf16.msra.mxu0 %v355
    %443 = vmatpush.bf16.msra.mxu0 %v351
    %444 = vmatpush.bf16.msra.mxu0 %v347
    %445 = vmatpush.bf16.msra.mxu0 %v343
    %446 = vmatpush.bf16.msra.mxu0 %v339
    %447 = vmatmul.bf16.gmra.mxu0 %v141
    %v448 = vpop.f32.mrf.mxu0
    %v449 = vadd.f32 %v237, %v448
    %v450 = vpop.f32.mrf.mxu0
    %451 = vdwg.mxu0
    %v452 = vld [vmem:[#allocation10] sm:$0xf]
    %v454 = vperm.slane %v452, 0
    %v455 = vperm.slane %v452, 1
    %v456 = vperm.slane %v452, 2
    %v457 = vperm.slane %v452, 3
    %v462 = vadd.f32 %v410, %v454
    %v463 = vadd.f32 %v423, %v455
    %v464 = vadd.f32 %v436, %v456
    %v465 = vadd.f32 %v449, %v457
    %v466 = vxor.u32 %v462, 2147483648
    %v467 = vmul.f32 %v466, 1.442695
    %v468 = vpow.pop %v467
    %v469 = vadd.f32 %v468, 1.0
    %v470 = vrcp.pop %v469
    %v471 = vmul.f32 %v469, %v470
    %v472 = vsub.f32 1.0, %v471
    %v473 = vmul.f32 %v470, %v472
    %v474 = vadd.f32 %v470, %v473
    %vm475 = vweird.f32 %v469
    %vm476 = vweird.f32 %v470
    %vm477 = vmor %vm475, %vm476
    %v478 = vsel %vm477, %v470, %v474
    %v479 = vand.u32 2147483647, %v469
    %vm480 = vcmp.eq.f32.partialorder %v479, 8.507059e+37
    %v481 = vand.u32 %v469, 2147483648
    %v482 = vor.u32 1.1754944e-38, %v481
    %v483 = vsel %vm480, %v482, %v478
    %v484 = vmul.f32 1.0, %v483
    %v485 = vxor.u32 %v463, 2147483648
    %v486 = vmul.f32 %v485, 1.442695
    %v487 = vpow.pop %v486
    %v488 = vadd.f32 %v487, 1.0
    %v489 = vrcp.pop %v488
    %v490 = vmul.f32 %v488, %v489
    %v491 = vsub.f32 1.0, %v490
    %v492 = vmul.f32 %v489, %v491
    %v493 = vadd.f32 %v489, %v492
    %vm494 = vweird.f32 %v488
    %vm495 = vweird.f32 %v489
    %vm496 = vmor %vm494, %vm495
    %v497 = vsel %vm496, %v489, %v493
    %v498 = vand.u32 2147483647, %v488
    %vm499 = vcmp.eq.f32.partialorder %v498, 8.507059e+37
    %v500 = vand.u32 %v488, 2147483648
    %v501 = vor.u32 1.1754944e-38, %v500
    %v502 = vsel %vm499, %v501, %v497
    %v503 = vmul.f32 1.0, %v502
    %v504 = vmul.f32 %v484, %v465
    %v505 = vadd.f32 %v464, %v504
    %v506 = vtanh.pop %v505
    %v507 = vsub.f32 1.0, %v503
    %v508 = vmul.f32 %v507, %v506
    %v509 = vmul.f32 %v503, %v100
    %v510 = vadd.f32 %v508, %v509
    %511 = vadd.xlane.f32.xlu0 %v510
    %v512 = vpop.xlane.xlu0 %511
    %v513 = vmul.f32 %v512, 0.03125
    %v514 = vmul.f32 %v510, %v510
    %515 = vadd.xlane.f32.xlu0 %v514
    %v516 = vpop.xlane.xlu0 %515
    %v517 = vmul.f32 %v516, 0.03125
    %v518 = vmul.f32 %v513, %v513
    %v519 = vsub.f32 %v517, %v518
    %v520 = vadd.f32 %v519, 1e-05
    %v521 = vrsqrt.pop %v520
    %v522 = vmul.f32 %v521, %v520
    %v523 = vmul.f32 %v522, %v521
    %v524 = vmul.f32 0.5, %v523
    %v525 = vsub.f32 1.5, %v524
    %v526 = vmul.f32 %v521, %v525
    %vm527 = vweird.f32 %v520
    %vm528 = vweird.f32 %v521
    %vm529 = vmor %vm527, %vm528
    %v530 = vsel %vm529, %v521, %v526
    %v531 = vld [vmem:[%s5] sm:$0x3]
    %v532 = vsub.f32 %v510, %v513
    %v533 = vmul.f32 %v532, %v530
    %v534 = vperm.slane %v531, 0
    %v535 = vmul.f32 %v533, %v534
    %v536 = vperm.slane %v531, 1
    %v537 = vadd.f32 %v535, %v536
    %538 = vst [vmem:[#allocation11] sm:$0xff] %v537
    %539 = vst [vmem:[#allocation12] sm:$0xff] %v510
    // Predicated region
    $region46: #{tpu_custom_call.1} parent=1 // pred_check
      _
    $region47: #{tpu_custom_call.1} parent=1 // pred_check_branch
      %541 = sbr.rel (0) target = $region49
    $region48: #{tpu_custom_call.1} parent=1 // pred_region
      %543 = vsyncadd [#allocation4], 0
      %s545 = sshll.u32 [#allocation11], 4
      %s546 = int_to_ptr.vmem [resolvable:$true] %s545
      %s547 = sshll.u32 %s6, 4
      %s548 = int_to_ptr.hbm [resolvable:$true] %s547
      %550 = dma.vmem_to_hbm [thread:$0]  %s546, 128, %s548, [#allocation4]
    $region49: #{tpu_custom_call.1} parent=1 // pred_fallthru
      _
    // Predicated region
    $region50: #{tpu_custom_call.1} parent=1 // pred_check
      _
    $region51: #{tpu_custom_call.1} parent=1 // pred_check_branch
      %552 = sbr.rel (0) target = $region53
    $region52: #{tpu_custom_call.1} parent=1 // pred_region
      %554 = vsyncadd [#allocation13], 0
      %s556 = sshll.u32 [#allocation12], 4
      %s557 = int_to_ptr.vmem [resolvable:$true] %s556
      %s558 = sshll.u32 %s7, 4
      %s559 = int_to_ptr.hbm [resolvable:$true] %s558
      %561 = dma.vmem_to_hbm [thread:$0]  %s557, 128, %s559, [#allocation13]
    $region53: #{tpu_custom_call.1} parent=1 // pred_fallthru
      _
    // Predicated region
    $region54: #{tpu_custom_call.1} parent=1 // pred_check
      _
    $region55: #{tpu_custom_call.1} parent=1 // pred_check_branch
      %563 = sbr.rel (0) target = $region57
    $region56: #{tpu_custom_call.1} parent=1 // pred_region
      %565 = dma.done [#allocation4], 128
    $region57: #{tpu_custom_call.1} parent=1 // pred_fallthru
      _
    // Predicated region
    $region58: #{tpu_custom_call.1} parent=1 // pred_check
      _
    $region59: #{tpu_custom_call.1} parent=1 // pred_check_branch
      %567 = sbr.rel (0) target = $region61
    $region60: #{tpu_custom_call.1} parent=1 // pred_region
      %569 = dma.done [#allocation13], 128
    $region61: #{tpu_custom_call.1} parent=1 // pred_fallthru
      _
    %570 = vsyncpa [#allocation3], 1
    %571 = vsyncpa [#allocation6], 1
    %572 = vsyncpa [#allocation9], 1
    %573 = vsyncpa [#allocation4], 1
    %574 = vsyncpa [#allocation13], 1

</llo_original>
